<compile_context>
chip_gen: v7x
topology: tpu7x:2x2x1
jax: 0.10.0
libtpu: 0.0.40
codegen_flags: <defaults>
</compile_context>

<pallas_src>
from functools import partial

import jax
import jax.numpy as jnp
from jax import lax
from jax.experimental import pallas as pl
from jax.experimental.pallas import tpu as pltpu

K = 5     # conv kernel size
PAD = 2   # conv padding


def fused_conv_bn_relu_kernel(patchesT_ref, wT_ref, bias_ref, gamma_ref,
                              beta_ref, o_ref, *, N, HW, eps):
    """Fused 5x5 conv (one transposed im2col matmul) + training-mode
    BatchNorm + ReLU for the whole batch.

    patchesT_ref: (K*K*Cin, N*H*W)  im2col patches, rows (kh, kw, cin),
                                    columns (n, h, w)
    wT_ref:       (Cout, K*K*Cin)   weights, columns ordered (kh, kw, cin)
    bias_ref:     (Cout, 1)         conv bias
    gamma_ref:    (Cout, 1)         BN weight
    beta_ref:     (Cout, 1)         BN bias
    o_ref:        (N, Cout, H*W)    NCHW-native output
    """
    # One MXU contraction: (Cout, KKC) @ (KKC, N*HW) -> (Cout, N*HW).
    # Channels on sublanes, (n, h, w) on lanes -> lane-dense accumulator.
    acc = jnp.dot(wT_ref[...], patchesT_ref[...],
                  preferred_element_type=jnp.float32)
    acc = acc + bias_ref[...]                          # (Cout, 1) lane broadcast

    # Training-mode BN: biased batch statistics over (N, H, W) == lane axis.
    # TODO(synk): single-pass E[x^2]-E[x]^2 can cancel badly if activation
    # magnitudes grow; switch to a shifted/two-pass form if that happens.
    count = float(N * HW)
    mean = jnp.sum(acc, axis=1, keepdims=True) / count             # (Cout, 1)
    var = jnp.sum(acc * acc, axis=1, keepdims=True) / count - mean * mean
    var = jnp.maximum(var, 0.0)                        # guard tiny negatives
    inv = gamma_ref[...] * lax.rsqrt(var + eps)                    # (Cout, 1)
    shift = beta_ref[...] - mean * inv                             # (Cout, 1)

    y = jnp.maximum(acc * inv + shift, 0.0)                        # (Cout, N*HW)

    # NCHW-native writeback: per-batch (Cout, H*W) slab; static lane-aligned
    # slices (offsets are multiples of 256 lanes), so no relayout.
    for n in range(N):
        o_ref[n] = y[:, n * HW:(n + 1) * HW]


def conv_bn_relu(x_nchw, w_oihw, bias, gamma, beta, eps=1e-5):
    """Forward pass of model3 (training-mode BatchNorm batch statistics)."""
    N, Cin, H, W = x_nchw.shape
    Cout = w_oihw.shape[0]
    KKC = K * K * Cin
    HW = H * W

    x = x_nchw.astype(jnp.float32)
    xp = jnp.pad(x, ((0, 0), (0, 0), (PAD, PAD), (PAD, PAD)))

    # Transposed im2col built once in the wrapper (cheap XLA glue, done in
    # HBM): rows ordered (kh, kw, cin), columns ordered (n, h, w).
    rows = []
    for kh in range(K):
        for kw in range(K):
            sl = xp[:, :, kh:kh + H, kw:kw + W]                # (N, Cin, H, W)
            rows.append(jnp.transpose(sl, (1, 0, 2, 3)).reshape(Cin, N * HW))
    patchesT = jnp.concatenate(rows, axis=0)                   # (KKC, N*HW)

    # OIHW -> (Cout, (kh, kw, cin)) to match the patch row ordering.
    wT = jnp.transpose(w_oihw, (0, 2, 3, 1)).astype(jnp.float32)
    wT = wT.reshape(Cout, KKC)

    bias2 = bias.astype(jnp.float32).reshape(Cout, 1)
    gamma2 = gamma.astype(jnp.float32).reshape(Cout, 1)
    beta2 = beta.astype(jnp.float32).reshape(Cout, 1)

    out = pl.pallas_call(
        partial(fused_conv_bn_relu_kernel, N=N, HW=HW, eps=eps),
        out_shape=jax.ShapeDtypeStruct((N, Cout, HW), jnp.float32),
        grid=(1,),
        in_specs=[
            pl.BlockSpec((KKC, N * HW), lambda i: (0, 0)),
            pl.BlockSpec((Cout, KKC), lambda i: (0, 0)),
            pl.BlockSpec((Cout, 1), lambda i: (0, 0)),
            pl.BlockSpec((Cout, 1), lambda i: (0, 0)),
            pl.BlockSpec((Cout, 1), lambda i: (0, 0)),
        ],
        out_specs=pl.BlockSpec((N, Cout, HW), lambda i: (0, 0, 0)),
        compiler_params=pltpu.CompilerParams(
            dimension_semantics=("arbitrary",)),
    )(patchesT, wT, bias2, gamma2, beta2)

    # (N, Cout, H*W) is already NCHW in row-major order; reshape is free.
    return out.reshape(N, Cout, H, W)


def _reference(x_nchw, w_oihw, bias, gamma, beta, eps=1e-5):
    """Pure-JAX reference (conv + training-mode BN + ReLU) in NCHW."""
    conv = jax.lax.conv_general_dilated(
        x_nchw.astype(jnp.float32), w_oihw.astype(jnp.float32),
        window_strides=(1, 1), padding=((PAD, PAD), (PAD, PAD)),
        dimension_numbers=("NCHW", "OIHW", "NCHW"))
    conv = conv + bias.reshape(1, -1, 1, 1)
    mean = jnp.mean(conv, axis=(0, 2, 3), keepdims=True)
    var = jnp.var(conv, axis=(0, 2, 3), keepdims=True)
    y = (conv - mean) / jnp.sqrt(var + eps)
    y = y * gamma.reshape(1, -1, 1, 1) + beta.reshape(1, -1, 1, 1)
    return jnp.maximum(y, 0.0)


if __name__ == "__main__":
    # Small shapes consistent with the module: N=2, ch_in=4, ch_out=8, 16x16.
    N, CIN, COUT, H, W = 2, 4, 8, 16, 16

    key = jax.random.PRNGKey(0)
    kx, kw, kb, kg, kbt = jax.random.split(key, 5)

    x = jax.random.normal(kx, (N, CIN, H, W), dtype=jnp.float32)
    w = jax.random.normal(kw, (COUT, CIN, K, K), dtype=jnp.float32) * 0.1
    b = jax.random.normal(kb, (COUT,), dtype=jnp.float32) * 0.1
    gamma = 1.0 + 0.1 * jax.random.normal(kg, (COUT,), dtype=jnp.float32)
    beta = 0.1 * jax.random.normal(kbt, (COUT,), dtype=jnp.float32)

    out = conv_bn_relu(x, w, b, gamma, beta)
    out = jax.block_until_ready(out)

    assert out.shape == (N, COUT, H, W), out.shape
    assert bool(jnp.all(jnp.isfinite(out)))

    ref = jax.block_until_ready(_reference(x, w, b, gamma, beta))
    assert bool(jnp.allclose(out, ref, atol=2e-2, rtol=2e-2)), \
        float(jnp.max(jnp.abs(out - ref)))

    print("KERNEL_OK")
</pallas_src>

<mosaic_0001>
module attributes {stable_mosaic.version = 11 : i64} {
  func.func @fused_conv_bn_relu_kernel(%arg0: i32, %arg1: memref<100x512xf32, #tpu.memory_space<vmem>>, %arg2: memref<8x100xf32, #tpu.memory_space<vmem>>, %arg3: memref<8x1xf32, #tpu.memory_space<vmem>>, %arg4: memref<8x1xf32, #tpu.memory_space<vmem>>, %arg5: memref<8x1xf32, #tpu.memory_space<vmem>>, %arg6: memref<2x8x256xf32, #tpu.memory_space<vmem>>) attributes {dimension_semantics = [#tpu.dimension_semantics<arbitrary>], iteration_bounds = array<i64: 1>, scalar_prefetch = 0 : i64, scratch_operands = 0 : i64, tpu.core_type = #tpu.core_type<tc>, window_params = [{pipeline_mode = #tpu.pipeline_mode<synchronous>, transform_indices = @transform_0, window_bounds = array<i64: 100, 512>}, {pipeline_mode = #tpu.pipeline_mode<synchronous>, transform_indices = @transform_1, window_bounds = array<i64: 8, 100>}, {pipeline_mode = #tpu.pipeline_mode<synchronous>, transform_indices = @transform_2, window_bounds = array<i64: 8, 1>}, {pipeline_mode = #tpu.pipeline_mode<synchronous>, transform_indices = @transform_3, window_bounds = array<i64: 8, 1>}, {pipeline_mode = #tpu.pipeline_mode<synchronous>, transform_indices = @transform_4, window_bounds = array<i64: 8, 1>}, {pipeline_mode = #tpu.pipeline_mode<synchronous>, transform_indices = @transform_5, window_bounds = array<i64: 2, 8, 256>}]} {
    %c0 = arith.constant 0 : index
    %c0_0 = arith.constant 0 : index
    %0 = vector.load %arg2[%c0, %c0_0] : memref<8x100xf32, #tpu.memory_space<vmem>>, vector<8x100xf32>
    %c0_1 = arith.constant 0 : index
    %c0_2 = arith.constant 0 : index
    %1 = vector.load %arg1[%c0_1, %c0_2] : memref<100x512xf32, #tpu.memory_space<vmem>>, vector<100x512xf32>
    %cst = arith.constant dense<0.000000e+00> : vector<8x512xf32>
    %2 = tpu.matmul %0, %1, %cst {dimension_numbers = #tpu.dot_dimension_numbers<[1], [0], [0], [1], [0, 0, 1, 1], [], []>} : vector<8x100xf32>, vector<100x512xf32>, vector<8x512xf32> -> vector<8x512xf32>
    %c0_3 = arith.constant 0 : index
    %c0_4 = arith.constant 0 : index
    %3 = vector.load %arg3[%c0_3, %c0_4] : memref<8x1xf32, #tpu.memory_space<vmem>>, vector<8x1xf32>
    %4 = vector.broadcast %3 : vector<8x1xf32> to vector<8x512xf32>
    %5 = arith.addf %2, %4 : vector<8x512xf32>
    %cst_5 = arith.constant dense<0.000000e+00> : vector<8xf32>
    %6 = vector.multi_reduction <add>, %5, %cst_5 [1] : vector<8x512xf32> to vector<8xf32>
    %7 = vector.shape_cast %6 : vector<8xf32> to vector<8x1xf32>
    %cst_6 = arith.constant 5.120000e+02 : f32
    %8 = vector.broadcast %cst_6 : f32 to vector<8x1xf32>
    %9 = arith.divf %7, %8 : vector<8x1xf32>
    %10 = arith.mulf %5, %5 : vector<8x512xf32>
    %cst_7 = arith.constant dense<0.000000e+00> : vector<8xf32>
    %11 = vector.multi_reduction <add>, %10, %cst_7 [1] : vector<8x512xf32> to vector<8xf32>
    %12 = vector.shape_cast %11 : vector<8xf32> to vector<8x1xf32>
    %cst_8 = arith.constant 5.120000e+02 : f32
    %13 = vector.broadcast %cst_8 : f32 to vector<8x1xf32>
    %14 = arith.divf %12, %13 : vector<8x1xf32>
    %15 = arith.mulf %9, %9 : vector<8x1xf32>
    %16 = arith.subf %14, %15 : vector<8x1xf32>
    %cst_9 = arith.constant 0.000000e+00 : f32
    %17 = vector.broadcast %cst_9 : f32 to vector<8x1xf32>
    %18 = arith.maximumf %16, %17 : vector<8x1xf32>
    %c0_10 = arith.constant 0 : index
    %c0_11 = arith.constant 0 : index
    %19 = vector.load %arg4[%c0_10, %c0_11] : memref<8x1xf32, #tpu.memory_space<vmem>>, vector<8x1xf32>
    %cst_12 = arith.constant 9.99999974E-6 : f32
    %20 = vector.broadcast %cst_12 : f32 to vector<8x1xf32>
    %21 = arith.addf %18, %20 : vector<8x1xf32>
    %22 = math.rsqrt %21 : vector<8x1xf32>
    %23 = arith.mulf %19, %22 : vector<8x1xf32>
    %c0_13 = arith.constant 0 : index
    %c0_14 = arith.constant 0 : index
    %24 = vector.load %arg5[%c0_13, %c0_14] : memref<8x1xf32, #tpu.memory_space<vmem>>, vector<8x1xf32>
    %25 = arith.mulf %9, %23 : vector<8x1xf32>
    %26 = arith.subf %24, %25 : vector<8x1xf32>
    %27 = vector.broadcast %23 : vector<8x1xf32> to vector<8x512xf32>
    %28 = arith.mulf %5, %27 : vector<8x512xf32>
    %29 = vector.broadcast %26 : vector<8x1xf32> to vector<8x512xf32>
    %30 = arith.addf %28, %29 : vector<8x512xf32>
    %cst_15 = arith.constant 0.000000e+00 : f32
    %31 = vector.broadcast %cst_15 : f32 to vector<8x512xf32>
    %32 = arith.maximumf %30, %31 : vector<8x512xf32>
    %33 = vector.extract_strided_slice %32 {offsets = [0, 0], sizes = [8, 256], strides = [1, 1]} : vector<8x512xf32> to vector<8x256xf32>
    %c0_16 = arith.constant 0 : index
    %c0_17 = arith.constant 0 : index
    %c0_18 = arith.constant 0 : index
    %34 = vector.load %arg6[%c0_16, %c0_17, %c0_18] : memref<2x8x256xf32, #tpu.memory_space<vmem>>, vector<1x8x256xf32>
    %35 = vector.shape_cast %34 : vector<1x8x256xf32> to vector<8x256xf32>
    %36 = vector.shape_cast %33 : vector<8x256xf32> to vector<1x8x256xf32>
    tpu.vector_store %arg6[%c0_16, %c0_17, %c0_18], %36 {strides = array<i32>} : memref<2x8x256xf32, #tpu.memory_space<vmem>>, vector<1x8x256xf32>,
    %37 = vector.extract_strided_slice %32 {offsets = [0, 256], sizes = [8, 256], strides = [1, 1]} : vector<8x512xf32> to vector<8x256xf32>
    %c1 = arith.constant 1 : index
    %c0_19 = arith.constant 0 : index
    %c0_20 = arith.constant 0 : index
    %38 = vector.load %arg6[%c1, %c0_19, %c0_20] : memref<2x8x256xf32, #tpu.memory_space<vmem>>, vector<1x8x256xf32>
    %39 = vector.shape_cast %38 : vector<1x8x256xf32> to vector<8x256xf32>
    %40 = vector.shape_cast %37 : vector<8x256xf32> to vector<1x8x256xf32>
    tpu.vector_store %arg6[%c1, %c0_19, %c0_20], %40 {strides = array<i32>} : memref<2x8x256xf32, #tpu.memory_space<vmem>>, vector<1x8x256xf32>,
    return
  }
  func.func @transform_0(%arg0: i32) -> (i32, i32) {
    %c0_i32 = arith.constant 0 : i32
    %c0_i32_0 = arith.constant 0 : i32
    %c0_i32_1 = arith.constant 0 : i32
    return %c0_i32, %c0_i32_0 : i32, i32
  }
  func.func @transform_1(%arg0: i32) -> (i32, i32) {
    %c0_i32 = arith.constant 0 : i32
    %c0_i32_0 = arith.constant 0 : i32
    %c0_i32_1 = arith.constant 0 : i32
    return %c0_i32, %c0_i32_0 : i32, i32
  }
  func.func @transform_2(%arg0: i32) -> (i32, i32) {
    %c0_i32 = arith.constant 0 : i32
    %c0_i32_0 = arith.constant 0 : i32
    %c0_i32_1 = arith.constant 0 : i32
    return %c0_i32, %c0_i32_0 : i32, i32
  }
  func.func @transform_3(%arg0: i32) -> (i32, i32) {
    %c0_i32 = arith.constant 0 : i32
    %c0_i32_0 = arith.constant 0 : i32
    %c0_i32_1 = arith.constant 0 : i32
    return %c0_i32, %c0_i32_0 : i32, i32
  }
  func.func @transform_4(%arg0: i32) -> (i32, i32) {
    %c0_i32 = arith.constant 0 : i32
    %c0_i32_0 = arith.constant 0 : i32
    %c0_i32_1 = arith.constant 0 : i32
    return %c0_i32, %c0_i32_0 : i32, i32
  }
  func.func @transform_5(%arg0: i32) -> (i32, i32, i32) {
    %c0_i32 = arith.constant 0 : i32
    %c0_i32_0 = arith.constant 0 : i32
    %c0_i32_1 = arith.constant 0 : i32
    %c0_i32_2 = arith.constant 0 : i32
    return %c0_i32, %c0_i32_0, %c0_i32_1 : i32, i32, i32
  }
}

</mosaic_0001>

<llo_original>
// kernel: tpu_custom_call.1
$region0: #{tpu_custom_call.1}
  #allocation0 [shape = 'u32[]', space=smem, size = 0x4, offset = 0x4, fixed_abs, tag = 'smem constant byte address 0x4 - core index']
  #allocation1 [shape = 'u32[144,128]{1,0:T(1,128)}', space=vmem, size = 0x12000, scoped, tag = 'internal scratch']
  %s0 = inlined_call_operand.hbm [shape: f32[100,512], index: 0, kind: input, shape index: {}]
  %s1 = inlined_call_operand.vmem [shape: f32[8,100], index: 1, kind: input, shape index: {}]
  %s2 = inlined_call_operand.vmem [shape: f32[8,1], index: 2, kind: input, shape index: {}]
  %s3 = inlined_call_operand.vmem [shape: f32[8,1], index: 3, kind: input, shape index: {}]
  %s4 = inlined_call_operand.vmem [shape: f32[8,1], index: 4, kind: input, shape index: {}]
  %s5 = inlined_call_operand.hbm [shape: f32[2,8,256], index: 5, kind: output, shape index: {}]
  %s6 = sld [smem:[#allocation0]]
  $region34: #{tpu_custom_call.1} parent=0
    _
  %s8 = ssub.s32 1, %s6
  %s9 = scalar_select 0, %s8, %s6
  $region1: #{tpu_custom_call.1} parent=0
    #allocation2 [shape = 'u8[212992]{0}', space=vmem, size = 0x34000, scoped, tag = 'input window, operand 0, single buffered']
    #allocation3 [shape = 's32[1]{0}', space=sflag, size = 0x4, scoped, tag = 'scoped memory for tpu_custom_call.1']
    #allocation4 [shape = 's32[1]{0}', space=sflag, size = 0x4, scoped, tag = 'scoped memory for tpu_custom_call.1']
    #allocation5 [shape = 'u8[16384]{0}', space=vmem, size = 0x4000, scoped, tag = 'output window, operand 0, single buffered']
    %10 = vsyncpa [#allocation3], 0
    %11 = vsyncpa [#allocation4], 0
    // Predicated region
    $region2: #{tpu_custom_call.1} parent=1 // pred_check
      _
    $region3: #{tpu_custom_call.1} parent=1 // pred_check_branch
      %13 = sbr.rel (0) target = $region5
    $region4: #{tpu_custom_call.1} parent=1 // pred_region
      %s15 = ssub.s32 6656, 6656
      %16 = vsyncadd [#allocation3], %s15
      %s17 = sshll.u32 [#allocation2], 4
      %s18 = int_to_ptr.vmem [resolvable:$true] %s17
      %23 = dma.hbm_to_vmem [thread:$0]  %s0, 6656, %s18, [#allocation3], 512, 512, 32
    $region5: #{tpu_custom_call.1} parent=1 // pred_fallthru
      _
    // Predicated region
    $region6: #{tpu_custom_call.1} parent=1 // pred_check
      _
    $region7: #{tpu_custom_call.1} parent=1 // pred_check_branch
      %25 = sbr.rel (0) target = $region9
    $region8: #{tpu_custom_call.1} parent=1 // pred_region
      _
    $region9: #{tpu_custom_call.1} parent=1 // pred_fallthru
      _
    // Predicated region
    $region10: #{tpu_custom_call.1} parent=1 // pred_check
      _
    $region11: #{tpu_custom_call.1} parent=1 // pred_check_branch
      %27 = sbr.rel (0) target = $region13
    $region12: #{tpu_custom_call.1} parent=1 // pred_region
      _
    $region13: #{tpu_custom_call.1} parent=1 // pred_fallthru
      _
    // Predicated region
    $region14: #{tpu_custom_call.1} parent=1 // pred_check
      _
    $region15: #{tpu_custom_call.1} parent=1 // pred_check_branch
      %29 = sbr.rel (0) target = $region17
    $region16: #{tpu_custom_call.1} parent=1 // pred_region
      _
    $region17: #{tpu_custom_call.1} parent=1 // pred_fallthru
      _
    // Predicated region
    $region18: #{tpu_custom_call.1} parent=1 // pred_check
      _
    $region19: #{tpu_custom_call.1} parent=1 // pred_check_branch
      %31 = sbr.rel (0) target = $region21
    $region20: #{tpu_custom_call.1} parent=1 // pred_region
      _
    $region21: #{tpu_custom_call.1} parent=1 // pred_fallthru
      _
    // Predicated region
    $region22: #{tpu_custom_call.1} parent=1 // pred_check
      _
    $region23: #{tpu_custom_call.1} parent=1 // pred_check_branch
      %33 = sbr.rel (0) target = $region25
    $region24: #{tpu_custom_call.1} parent=1 // pred_region
      %34 = dma.done [#allocation3], 6656
    $region25: #{tpu_custom_call.1} parent=1 // pred_fallthru
      _
    %v35 = vld [vmem:[%s1] sm:$0xff]
    %v36 = vld [vmem:[#allocation2] sm:$0xff]
    %v37 = vld [vmem:[#allocation2 + $0x8] sm:$0xff]
    %v38 = vld [vmem:[#allocation2 + $0x10] sm:$0xff]
    %v39 = vld [vmem:[#allocation2 + $0x18] sm:$0xff]
    %v40 = vld [vmem:[#allocation2 + $0x20] sm:$0xff]
    %v41 = vld [vmem:[#allocation2 + $0x28] sm:$0xff]
    %v42 = vld [vmem:[#allocation2 + $0x30] sm:$0xff]
    %v43 = vld [vmem:[#allocation2 + $0x38] sm:$0xff]
    %v44 = vld [vmem:[#allocation2 + $0x40] sm:$0xff]
    %v45 = vld [vmem:[#allocation2 + $0x48] sm:$0xff]
    %v46 = vld [vmem:[#allocation2 + $0x50] sm:$0xff]
    %v47 = vld [vmem:[#allocation2 + $0x58] sm:$0xff]
    %v48 = vld [vmem:[#allocation2 + $0x60] sm:$0xff]
    %v49 = vld [vmem:[#allocation2 + $0x68] sm:$0xff]
    %v50 = vld [vmem:[#allocation2 + $0x70] sm:$0xff]
    %v51 = vld [vmem:[#allocation2 + $0x78] sm:$0xff]
    %v52 = vld [vmem:[#allocation2 + $0x80] sm:$0xff]
    %v53 = vld [vmem:[#allocation2 + $0x88] sm:$0xff]
    %v54 = vld [vmem:[#allocation2 + $0x90] sm:$0xff]
    %v55 = vld [vmem:[#allocation2 + $0x98] sm:$0xff]
    %v56 = vld [vmem:[#allocation2 + $0xa0] sm:$0xff]
    %v57 = vld [vmem:[#allocation2 + $0xa8] sm:$0xff]
    %v58 = vld [vmem:[#allocation2 + $0xb0] sm:$0xff]
    %v59 = vld [vmem:[#allocation2 + $0xb8] sm:$0xff]
    %v60 = vld [vmem:[#allocation2 + $0xc0] sm:$0xff]
    %v61 = vld [vmem:[#allocation2 + $0xc8] sm:$0xff]
    %v62 = vld [vmem:[#allocation2 + $0xd0] sm:$0xff]
    %v63 = vld [vmem:[#allocation2 + $0xd8] sm:$0xff]
    %v64 = vld [vmem:[#allocation2 + $0xe0] sm:$0xff]
    %v65 = vld [vmem:[#allocation2 + $0xe8] sm:$0xff]
    %v66 = vld [vmem:[#allocation2 + $0xf0] sm:$0xff]
    %v67 = vld [vmem:[#allocation2 + $0xf8] sm:$0xff]
    %v68 = vld [vmem:[#allocation2 + $0x100] sm:$0xff]
    %v69 = vld [vmem:[#allocation2 + $0x108] sm:$0xff]
    %v70 = vld [vmem:[#allocation2 + $0x110] sm:$0xff]
    %v71 = vld [vmem:[#allocation2 + $0x118] sm:$0xff]
    %v72 = vld [vmem:[#allocation2 + $0x120] sm:$0xff]
    %v73 = vld [vmem:[#allocation2 + $0x128] sm:$0xff]
    %v74 = vld [vmem:[#allocation2 + $0x130] sm:$0xff]
    %v75 = vld [vmem:[#allocation2 + $0x138] sm:$0xff]
    %v76 = vld [vmem:[#allocation2 + $0x140] sm:$0xff]
    %v77 = vld [vmem:[#allocation2 + $0x148] sm:$0xff]
    %v78 = vld [vmem:[#allocation2 + $0x150] sm:$0xff]
    %v79 = vld [vmem:[#allocation2 + $0x158] sm:$0xff]
    %v80 = vld [vmem:[#allocation2 + $0x160] sm:$0xff]
    %v81 = vld [vmem:[#allocation2 + $0x168] sm:$0xff]
    %v82 = vld [vmem:[#allocation2 + $0x170] sm:$0xff]
    %v83 = vld [vmem:[#allocation2 + $0x178] sm:$0xff]
    %v84 = vld [vmem:[#allocation2 + $0x180] sm:$0xf]
    %v85 = vld [vmem:[#allocation2 + $0x188] sm:$0xf]
    %v86 = vld [vmem:[#allocation2 + $0x190] sm:$0xf]
    %v87 = vld [vmem:[#allocation2 + $0x198] sm:$0xf]
    %v88 = vld [vmem:[%s2] sm:$0xff]
    %90 = vset.pattern.permute.xlu0 0
    %91 = vperm.xlu0 %90, %v88
    %v92 = vpop.permute.xlu0 %91
    %vm94 = vcmask 818176
    %v96 = vsel %vm94, %v35, 0
    %vm98 = vcmask 1043456
    %v100 = vsel %vm98, %v84, 0
    %v103 = vsel %vm98, %v85, 0
    %v106 = vsel %vm98, %v86, 0
    %v109 = vsel %vm98, %v87, 0
    %111 = vmatprep.subr.mxu0 %v37
    %112 = vmatpush1.msra.mxu0 %v36
    %113 = vmatprep.subr.mxu0 %v41
    %114 = vmatpush1.msra.mxu0 %v40
    %115 = vmatprep.subr.mxu0 %v45
    %116 = vmatpush1.msra.mxu0 %v44
    %117 = vmatprep.subr.mxu0 %v49
    %118 = vmatpush1.msra.mxu0 %v48
    %119 = vmatprep.subr.mxu0 %v53
    %120 = vmatpush1.msra.mxu0 %v52
    %121 = vmatprep.subr.mxu0 %v57
    %122 = vmatpush1.msra.mxu0 %v56
    %123 = vmatprep.subr.mxu0 %v61
    %124 = vmatpush1.msra.mxu0 %v60
    %125 = vmatprep.subr.mxu0 %v65
    %126 = vmatpush1.msra.mxu0 %v64
    %127 = vmatprep.subr.mxu0 %v69
    %128 = vmatpush1.msra.mxu0 %v68
    %129 = vmatprep.subr.mxu0 %v73
    %130 = vmatpush1.msra.mxu0 %v72
    %131 = vmatprep.subr.mxu0 %v77
    %132 = vmatpush1.msra.mxu0 %v76
    %133 = vmatprep.subr.mxu0 %v81
    %134 = vmatpush1.msra.mxu0 %v80
    %135 = vmatprep.subr.mxu0 %v103
    %136 = vmatpush1.msra.mxu0 %v100
    %137 = vmatprep.subr.mxu0 0.0
    %138 = vmatpush1.msra.mxu0 0.0
    %139 = vmatprep.subr.mxu0 0.0
    %140 = vmatpush1.msra.mxu0 0.0
    %141 = vmatprep.subr.mxu0 0.0
    %142 = vmatpush1.msra.mxu0 0.0
    %143 = vmatprep.subr.mxu0 0.0
    %144 = vmatpush1.msra.mxu0 0.0
    %145 = vmatprep.subr.mxu0 0.0
    %146 = vmatpush1.msra.mxu0 0.0
    %147 = vmatprep.subr.mxu0 0.0
    %148 = vmatpush1.msra.mxu0 0.0
    %149 = vmatprep.subr.mxu0 0.0
    %150 = vmatpush1.msra.mxu0 0.0
    %151 = vmatprep.subr.mxu0 0.0
    %152 = vmatpush1.msra.mxu0 0.0
    %153 = vmatprep.subr.mxu0 0.0
    %154 = vmatpush1.msra.mxu0 0.0
    %155 = vmatprep.subr.mxu0 0.0
    %156 = vmatpush1.msra.mxu0 0.0
    %157 = vmatprep.subr.mxu0 0.0
    %158 = vmatpush1.msra.mxu0 0.0
    %159 = vmatprep.subr.mxu0 0.0
    %160 = vmatpush1.msra.mxu0 0.0
    %161 = vmatprep.subr.mxu0 0.0
    %162 = vmatpush1.msra.mxu0 0.0
    %163 = vmatprep.subr.mxu0 0.0
    %164 = vmatpush1.msra.mxu0 0.0
    %165 = vmatprep.subr.mxu0 0.0
    %166 = vmatpush1.msra.mxu0 0.0
    %167 = vmatprep.subr.mxu0 0.0
    %168 = vmatpush1.msra.mxu0 0.0
    %169 = vmatprep.subr.mxu0 0.0
    %170 = vmatpush1.msra.mxu0 0.0
    %171 = vmatprep.subr.mxu0 0.0
    %172 = vmatpush1.msra.mxu0 0.0
    %173 = vmatprep.subr.mxu0 0.0
    %174 = vmatpush1.msra.mxu0 0.0
    %175 = vmatprep.mubr.f32.mxu0 0.0
    %176 = vmatmul.mubr.f32.gmra.mrb[0].mxu0 %v96
    %v177 = vpop.f32.mrb[0].mxu0
    %v178 = vadd.f32 %v92, %v177
    %v179 = vpop.f32.mrb[0].mxu0
    %v180 = vadd.f32 %v92, %v179
    %181 = vdwg.mxu0
    %182 = vmatprep.subr.mxu0 %v39
    %183 = vmatpush1.msra.mxu0 %v38
    %184 = vmatprep.subr.mxu0 %v43
    %185 = vmatpush1.msra.mxu0 %v42
    %186 = vmatprep.subr.mxu0 %v47
    %187 = vmatpush1.msra.mxu0 %v46
    %188 = vmatprep.subr.mxu0 %v51
    %189 = vmatpush1.msra.mxu0 %v50
    %190 = vmatprep.subr.mxu0 %v55
    %191 = vmatpush1.msra.mxu0 %v54
    %192 = vmatprep.subr.mxu0 %v59
    %193 = vmatpush1.msra.mxu0 %v58
    %194 = vmatprep.subr.mxu0 %v63
    %195 = vmatpush1.msra.mxu0 %v62
    %196 = vmatprep.subr.mxu0 %v67
    %197 = vmatpush1.msra.mxu0 %v66
    %198 = vmatprep.subr.mxu0 %v71
    %199 = vmatpush1.msra.mxu0 %v70
    %200 = vmatprep.subr.mxu0 %v75
    %201 = vmatpush1.msra.mxu0 %v74
    %202 = vmatprep.subr.mxu0 %v79
    %203 = vmatpush1.msra.mxu0 %v78
    %204 = vmatprep.subr.mxu0 %v83
    %205 = vmatpush1.msra.mxu0 %v82
    %206 = vmatprep.subr.mxu0 %v109
    %207 = vmatpush1.msra.mxu0 %v106
    %208 = vmatprep.subr.mxu0 0.0
    %209 = vmatpush1.msra.mxu0 0.0
    %210 = vmatprep.subr.mxu0 0.0
    %211 = vmatpush1.msra.mxu0 0.0
    %212 = vmatprep.subr.mxu0 0.0
    %213 = vmatpush1.msra.mxu0 0.0
    %214 = vmatprep.subr.mxu0 0.0
    %215 = vmatpush1.msra.mxu0 0.0
    %216 = vmatprep.subr.mxu0 0.0
    %217 = vmatpush1.msra.mxu0 0.0
    %218 = vmatprep.subr.mxu0 0.0
    %219 = vmatpush1.msra.mxu0 0.0
    %220 = vmatprep.subr.mxu0 0.0
    %221 = vmatpush1.msra.mxu0 0.0
    %222 = vmatprep.subr.mxu0 0.0
    %223 = vmatpush1.msra.mxu0 0.0
    %224 = vmatprep.subr.mxu0 0.0
    %225 = vmatpush1.msra.mxu0 0.0
    %226 = vmatprep.subr.mxu0 0.0
    %227 = vmatpush1.msra.mxu0 0.0
    %228 = vmatprep.subr.mxu0 0.0
    %229 = vmatpush1.msra.mxu0 0.0
    %230 = vmatprep.subr.mxu0 0.0
    %231 = vmatpush1.msra.mxu0 0.0
    %232 = vmatprep.subr.mxu0 0.0
    %233 = vmatpush1.msra.mxu0 0.0
    %234 = vmatprep.subr.mxu0 0.0
    %235 = vmatpush1.msra.mxu0 0.0
    %236 = vmatprep.subr.mxu0 0.0
    %237 = vmatpush1.msra.mxu0 0.0
    %238 = vmatprep.subr.mxu0 0.0
    %239 = vmatpush1.msra.mxu0 0.0
    %240 = vmatprep.subr.mxu0 0.0
    %241 = vmatpush1.msra.mxu0 0.0
    %242 = vmatprep.subr.mxu0 0.0
    %243 = vmatpush1.msra.mxu0 0.0
    %244 = vmatprep.subr.mxu0 0.0
    %245 = vmatpush1.msra.mxu0 0.0
    %246 = vmatprep.mubr.f32.mxu0 0.0
    %247 = vmatmul.mubr.f32.gmra.mrb[0].mxu0 %v96
    %v248 = vpop.f32.mrb[0].mxu0
    %v249 = vadd.f32 %v92, %v248
    %v250 = vpop.f32.mrb[0].mxu0
    %v251 = vadd.f32 %v92, %v250
    %252 = vdwg.mxu0
    %v253 = vadd.f32 %v178, %v180
    %v254 = vadd.f32 %v253, %v249
    %v255 = vadd.f32 %v254, %v251
    %256 = vadd.xlane.f32.xlu0 %v255
    %v257 = vpop.xlane.xlu0 %256
    %v258 = vrcp.pop 512.0
    %v259 = vmul.f32 %v257, %v258
    %v260 = vmul.f32 %v178, %v178
    %v261 = vmul.f32 %v180, %v180
    %v262 = vmul.f32 %v249, %v249
    %v263 = vmul.f32 %v251, %v251
    %v264 = vadd.f32 %v260, %v261
    %v265 = vadd.f32 %v264, %v262
    %v266 = vadd.f32 %v265, %v263
    %267 = vadd.xlane.f32.xlu0 %v266
    %v268 = vpop.xlane.xlu0 %267
    %v269 = vmul.f32 %v268, %v258
    %v270 = vmul.f32 %v259, %v259
    %v271 = vsub.f32 %v269, %v270
    %v272 = vmax.f32 %v271, 0.0
    %v273 = vld [vmem:[%s3] sm:$0xff]
    %v274 = vadd.f32 %v272, 1e-05
    %v275 = vrsqrt.pop %v274
    %v276 = vmul.f32 %v273, %v275
    %v277 = vld [vmem:[%s4] sm:$0xff]
    %v278 = vmul.f32 %v259, %v276
    %v279 = vsub.f32 %v277, %v278
    %281 = vset.pattern.permute.xlu0 0
    %282 = vperm.xlu0 %281, %v276
    %v283 = vpop.permute.xlu0 %282
    %v285 = vmul.f32 %v178, %v283
    %v286 = vmul.f32 %v180, %v283
    %v287 = vmul.f32 %v249, %v283
    %v288 = vmul.f32 %v251, %v283
    %290 = vset.pattern.permute.xlu0 0
    %291 = vperm.xlu0 %290, %v279
    %v292 = vpop.permute.xlu0 %291
    %v294 = vadd.f32 %v285, %v292
    %v295 = vadd.f32 %v286, %v292
    %v296 = vadd.f32 %v287, %v292
    %v297 = vadd.f32 %v288, %v292
    %v298 = vmax.f32 %v294, 0.0
    %v299 = vmax.f32 %v295, 0.0
    %v300 = vmax.f32 %v296, 0.0
    %v301 = vmax.f32 %v297, 0.0
    %302 = vst [vmem:[#allocation5] sm:$0xff] %v298
    %303 = vst [vmem:[#allocation5 + $0x8] sm:$0xff] %v299
    %s304 = scalar_lea.vmem [#allocation5], 16
    %305 = vst [vmem:[%s304] sm:$0xff] %v300
    %306 = vst [vmem:[%s304 + $0x8] sm:$0xff] %v301
    // Predicated region
    $region26: #{tpu_custom_call.1} parent=1 // pred_check
      _
    $region27: #{tpu_custom_call.1} parent=1 // pred_check_branch
      %308 = sbr.rel (0) target = $region29
    $region28: #{tpu_custom_call.1} parent=1 // pred_region
      %s310 = ssub.s32 512, 512
      %311 = vsyncadd [#allocation4], %s310
      %s312 = sshll.u32 [#allocation5], 4
      %s313 = int_to_ptr.vmem [resolvable:$true] %s312
      %318 = dma.vmem_to_hbm [thread:$0]  %s313, 512, %s5, [#allocation4], 256, 256, 16
    $region29: #{tpu_custom_call.1} parent=1 // pred_fallthru
      _
    // Predicated region
    $region30: #{tpu_custom_call.1} parent=1 // pred_check
      _
    $region31: #{tpu_custom_call.1} parent=1 // pred_check_branch
      %320 = sbr.rel (0) target = $region33
    $region32: #{tpu_custom_call.1} parent=1 // pred_region
      %321 = dma.done [#allocation4], 512
    $region33: #{tpu_custom_call.1} parent=1 // pred_fallthru
      _
    %322 = vsyncpa [#allocation3], 1
    %323 = vsyncpa [#allocation4], 1

</llo_original>
